<compile_context>
chip_gen: v7x
topology: tpu7x:2x2x1
jax: 0.10.0
libtpu: 0.0.40
codegen_flags: <defaults>
</compile_context>

<pallas_src>
import jax
import jax.numpy as jnp
from jax.experimental import pallas as pl
from jax.experimental.pallas import tpu as pltpu


_VMEM_LIMIT = 32 * 1024 * 1024   # scoped-VMEM budget safe on v5e/v6e/v7x
_LANE = 128                      # channel dims are padded to a multiple of this
_ACC_BUDGET_BYTES = 96 * 1024    # conv3x3 f32 accumulator cap (~24 vregs)


def _round_up(x, m):
    return (x + m - 1) // m * m


def _largest_divisor_leq(n, cap):
    cap = max(1, min(n, cap))
    for d in range(cap, 0, -1):
        if n % d == 0:
            return d
    return 1


def _pad_last(a, target):
    pad = target - a.shape[-1]
    if pad == 0:
        return a
    cfg = [(0, 0)] * (a.ndim - 1) + [(0, pad)]
    return jnp.pad(a, cfg)


# ----------------------------------------------------------------------------
# Host-side folding of inference BatchNorm into (padded) conv weights.
# ----------------------------------------------------------------------------
def _bn_scale_bias(bn_params, eps):
    gamma, beta, rmean, rvar = bn_params
    scale = gamma / jnp.sqrt(rvar + eps)
    bias = beta - rmean * scale
    return scale, bias


def fold_conv1x1_bn(w_torch, bn_params, cin_p, cout_p, *, eps, compute_dtype):
    """torch (Cout,Cin,1,1) weight + BN -> padded (cin_p,cout_p) weight, (1,cout_p) f32 bias."""
    cout, cin = w_torch.shape[0], w_torch.shape[1]
    scale, bias = _bn_scale_bias(bn_params, eps)
    w = w_torch.reshape(cout, cin).T * scale[None, :]            # (cin, cout)
    w = jnp.pad(w, ((0, cin_p - cin), (0, cout_p - cout))).astype(compute_dtype)
    b = jnp.pad(bias, (0, cout_p - cout)).astype(jnp.float32).reshape(1, cout_p)
    return w, b


def fold_conv3x3_bn(w_torch, bn_params, cin_p, cout_p, *, eps, compute_dtype):
    """torch (Cout,Cin,3,3) weight + BN -> padded (9,cin_p,cout_p) weight, (1,cout_p) f32 bias."""
    cout, cin = w_torch.shape[0], w_torch.shape[1]
    scale, bias = _bn_scale_bias(bn_params, eps)
    w = jnp.transpose(w_torch, (2, 3, 1, 0)).reshape(9, cin, cout) * scale[None, None, :]
    w = jnp.pad(w, ((0, 0), (0, cin_p - cin), (0, cout_p - cout))).astype(compute_dtype)
    b = jnp.pad(bias, (0, cout_p - cout)).astype(jnp.float32).reshape(1, cout_p)
    return w, b


# ----------------------------------------------------------------------------
# Kernel A: fused 1x1 conv(s).
#   out = [relu]( x @ w + bias [+ s @ w_sc] [+ residual] )
#   Grid: (M row tiles, Cout tiles).  BN pre-folded into w / bias.
# ----------------------------------------------------------------------------
def _make_fused_1x1_kernel(apply_relu, has_shortcut, has_residual):
    def kernel(x_ref, w_ref, b_ref, *rest):
        rest = list(rest)
        o_ref = rest.pop()
        y = jnp.dot(x_ref[...], w_ref[...], preferred_element_type=jnp.float32)
        y = y + b_ref[...]
        if has_shortcut:
            s_ref, ws_ref = rest
            y = y + jnp.dot(s_ref[...], ws_ref[...],
                            preferred_element_type=jnp.float32)
        elif has_residual:
            (r_ref,) = rest
            y = y + r_ref[...].astype(jnp.float32)
        if apply_relu:
            y = jnp.maximum(y, 0.0)
        o_ref[...] = y.astype(o_ref.dtype)
    return kernel


def fused_conv1x1(x2d, w, bias, *, shortcut=None, residual=None, relu,
                  out_dtype, block_m=512, block_n=512):
    """x2d:(M,Cin) @ w:(Cin,Cout) + bias [+ s2d@w_sc] [+ residual] [relu].

    All channel dims must already be padded to a multiple of 128.  A partial
    last M tile relies on Pallas masking the out-of-bounds output rows (the
    padded garbage rows are never written back) -- do not break this when
    refactoring to manual DMA.
    """
    assert not (shortcut is not None and residual is not None)
    M, Cin = x2d.shape
    Cout = w.shape[1]
    tm = min(block_m, _round_up(M, 8))
    tn = min(block_n, Cout)
    grid = (pl.cdiv(M, tm), pl.cdiv(Cout, tn))

    in_specs = [
        pl.BlockSpec((tm, Cin), lambda i, j: (i, 0)),
        pl.BlockSpec((Cin, tn), lambda i, j: (0, j)),
        pl.BlockSpec((1, tn), lambda i, j: (0, j)),
    ]
    args = [x2d, w, bias]
    if shortcut is not None:
        s2d, wsc = shortcut
        Csc = s2d.shape[1]
        in_specs += [pl.BlockSpec((tm, Csc), lambda i, j: (i, 0)),
                     pl.BlockSpec((Csc, tn), lambda i, j: (0, j))]
        args += [s2d, wsc]
    elif residual is not None:
        in_specs.append(pl.BlockSpec((tm, tn), lambda i, j: (i, j)))
        args.append(residual)

    kernel = _make_fused_1x1_kernel(relu, shortcut is not None, residual is not None)
    y2d = pl.pallas_call(
        kernel,
        grid=grid,
        in_specs=in_specs,
        out_specs=pl.BlockSpec((tm, tn), lambda i, j: (i, j)),
        out_shape=jax.ShapeDtypeStruct((M, Cout), out_dtype),
        compiler_params=pltpu.CompilerParams(
            dimension_semantics=("parallel", "parallel"),
            vmem_limit_bytes=_VMEM_LIMIT),
    )(*args)
    return y2d


# ----------------------------------------------------------------------------
# Kernel B: 3x3 conv (pad=1, stride s) + folded inference BN + relu.
#   Weights as (9, Cin, t_cout) so each tap is one (rows x Cin) matmul.
#   Output rows processed in a pl.loop over bounded chunks (small f32 acc).
#   stride=2 uses a wrapper-side even/odd phase decomposition so every tap is
#   a contiguous VMEM read.
# ----------------------------------------------------------------------------
def _make_conv3x3_kernel(Ho, Wo_pad, cin, t_cout, row_chunk, taps):
    n_chunks = Ho // row_chunk  # row_chunk always divides Ho

    def kernel(x_ref, w_ref, b_ref, o_ref):
        def compute_chunk(h0):
            acc = jnp.zeros((row_chunk * Wo_pad, t_cout), jnp.float32)
            for t, (r0, c0) in enumerate(taps):
                patch = x_ref[0, pl.ds(r0 + h0, row_chunk), pl.ds(c0, Wo_pad), :]
                # Wo_pad % 8 == 0, so this reshape is a layout-preserving
                # collapse (no cross-tile relayout).
                acc = acc + jnp.dot(patch.reshape(row_chunk * Wo_pad, cin),
                                    w_ref[t], preferred_element_type=jnp.float32)
            y = jnp.maximum(acc + b_ref[...], 0.0)
            o_ref[0, pl.ds(h0, row_chunk), :, :] = (
                y.reshape(row_chunk, Wo_pad, t_cout).astype(o_ref.dtype))

        if n_chunks == 1:
            compute_chunk(0)
        else:
            @pl.loop(0, n_chunks)
            def _(ci):
                compute_chunk(pl.multiple_of(ci * row_chunk, row_chunk))

    return kernel


def conv3x3_bn_relu(x_nhwc, w9, bias, *, stride=1, out_dtype=None,
                    compute_dtype=jnp.bfloat16, block_cout=256):
    """3x3 conv + folded BN + relu.  x_nhwc channels and w9/bias Cout already padded."""
    N, H, W, Cin = x_nhwc.shape
    Cout = w9.shape[2]
    if out_dtype is None:
        out_dtype = compute_dtype

    Ho = (H - 1) // stride + 1
    Wo = (W - 1) // stride + 1
    Wo_pad = _round_up(Wo, 8)   # keep in-kernel reshapes sublane-aligned

    # TODO(synk): the zero-pad (and stride-2 phase split) is one extra HBM pass
    # over the conv2 input; in a full network the previous layer could write a
    # pre-padded NHWC buffer, or the 1-px halo could be handled in-kernel with
    # masked border taps.
    if stride == 1:
        prep = jnp.pad(x_nhwc, ((0, 0), (1, 1), (1, 1 + (Wo_pad - Wo)), (0, 0)))
        taps = [(dy, dx) for dy in range(3) for dx in range(3)]
    else:
        assert stride == 2 and H % 2 == 0 and W % 2 == 0
        x_pad = jnp.pad(x_nhwc, ((0, 0), (1, 1), (1, 1), (0, 0)))
        # Even/odd phase decomposition: every tap becomes a contiguous read.
        phases = [x_pad[:, ry::2, rx::2, :] for ry in (0, 1) for rx in (0, 1)]
        prep = jnp.concatenate(phases, axis=1)        # (N, 4*(Ho+1), Wo+1, Cin)
        if Wo_pad != Wo:
            prep = jnp.pad(prep, ((0, 0), (0, 0), (0, Wo_pad - Wo), (0, 0)))
        taps = []
        for dy in range(3):
            for dx in range(3):
                ph = (dy % 2) * 2 + (dx % 2)
                taps.append((ph * (Ho + 1) + dy // 2, dx // 2))

    prep = prep.astype(compute_dtype)
    R, C = prep.shape[1], prep.shape[2]

    t_cout = min(block_cout, Cout)          # 256 matches v6e/v7x MXU; use 128 on v5e
    num_j = pl.cdiv(Cout, t_cout)

    # Bound the live f32 accumulator (review: keep well under the 64-vreg file).
    row_cap = max(1, _ACC_BUDGET_BYTES // (Wo_pad * t_cout * 4))
    row_chunk = _largest_divisor_leq(Ho, row_cap)
    kernel = _make_conv3x3_kernel(Ho, Wo_pad, Cin, t_cout, row_chunk, taps)

    # Grid-axis order: keep the LARGER operand's block index constant on the
    # inner axis so Pallas skips its re-DMA (weight-resident for late stages,
    # image-resident for early / spatially-large stages).
    itemsize = jnp.dtype(compute_dtype).itemsize
    weight_major = 9 * Cin * t_cout * itemsize > R * C * Cin * itemsize
    if weight_major:
        grid = (num_j, N)
        x_map = lambda j, n: (n, 0, 0, 0)
        w_map = lambda j, n: (0, 0, j)
        b_map = lambda j, n: (0, j)
        o_map = lambda j, n: (n, 0, 0, j)
    else:
        grid = (N, num_j)
        x_map = lambda n, j: (n, 0, 0, 0)
        w_map = lambda n, j: (0, 0, j)
        b_map = lambda n, j: (0, j)
        o_map = lambda n, j: (n, 0, 0, j)

    out = pl.pallas_call(
        kernel,
        grid=grid,
        in_specs=[pl.BlockSpec((1, R, C, Cin), x_map),
                  pl.BlockSpec((9, Cin, t_cout), w_map),
                  pl.BlockSpec((1, t_cout), b_map)],
        out_specs=pl.BlockSpec((1, Ho, Wo_pad, t_cout), o_map),
        out_shape=jax.ShapeDtypeStruct((N, Ho, Wo_pad, Cout), out_dtype),
        compiler_params=pltpu.CompilerParams(
            dimension_semantics=("parallel", "parallel"),
            vmem_limit_bytes=_VMEM_LIMIT),
    )(prep, w9, bias)

    if Wo_pad != Wo:
        out = out[:, :, :Wo, :]
    return out


# ----------------------------------------------------------------------------
# Bottleneck forward (Pallas) and parameter setup
# ----------------------------------------------------------------------------
def bottleneck_forward(x_nchw, p, *, stride=1, eps=1e-5,
                       compute_dtype=jnp.bfloat16,
                       block_m=512, block_n=512, block_cout3=256):
    N, Cin, H, W = x_nchw.shape
    planes = p["w1"].shape[0]
    C4 = p["w3"].shape[0]
    has_conv_sc = "w_sc" in p
    if not has_conv_sc:
        assert stride == 1 and Cin == C4, (
            "identity shortcut requires stride=1 and in_planes == expansion*planes")

    cin_p = _round_up(Cin, _LANE)
    c1_p = _round_up(planes, _LANE)
    c4_p = _round_up(C4, _LANE)

    # NCHW -> NHWC once; pad channels to a lane multiple.  (In a full network
    # keep NHWC / padded / bf16 between blocks and hoist these to the edges.)
    x = _pad_last(jnp.transpose(x_nchw, (0, 2, 3, 1)), cin_p)   # f32, padded
    x_c = x.astype(compute_dtype)
    M = N * H * W

    # conv1 (1x1) + bn1 + relu
    w1, b1 = fold_conv1x1_bn(p["w1"], p["bn1"], cin_p, c1_p, eps=eps,
                             compute_dtype=compute_dtype)
    out1 = fused_conv1x1(x_c.reshape(M, cin_p), w1, b1, relu=True,
                         out_dtype=compute_dtype,
                         block_m=block_m, block_n=block_n)
    out1 = out1.reshape(N, H, W, c1_p)

    # conv2 (3x3, stride) + bn2 + relu
    w2, b2 = fold_conv3x3_bn(p["w2"], p["bn2"], c1_p, c1_p, eps=eps,
                             compute_dtype=compute_dtype)
    out2 = conv3x3_bn_relu(out1, w2, b2, stride=stride,
                           out_dtype=compute_dtype, compute_dtype=compute_dtype,
                           block_cout=block_cout3)
    _, Ho, Wo, _ = out2.shape
    Mo = N * Ho * Wo
    out2_2d = out2.reshape(Mo, c1_p)

    # conv3 (1x1) + bn3, shortcut fused into the same kernel, + relu
    w3, b3 = fold_conv1x1_bn(p["w3"], p["bn3"], c1_p, c4_p, eps=eps,
                             compute_dtype=compute_dtype)
    if has_conv_sc:
        wsc, bsc = fold_conv1x1_bn(p["w_sc"], p["bn_sc"], cin_p, c4_p, eps=eps,
                                   compute_dtype=compute_dtype)
        # TODO(synk): for stride>1 the strided shortcut rows could be read
        # directly via a BlockSpec index_map instead of this XLA-side gather.
        x_s = x_c if stride == 1 else x_c[:, ::stride, ::stride, :]
        out = fused_conv1x1(out2_2d, w3, b3 + bsc,
                            shortcut=(x_s.reshape(Mo, cin_p), wsc),
                            relu=True, out_dtype=jnp.float32,
                            block_m=block_m, block_n=block_n)
    else:
        # Identity shortcut: residual added at full f32 precision.
        out = fused_conv1x1(out2_2d, w3, b3,
                            residual=x.reshape(M, c4_p),
                            relu=True, out_dtype=jnp.float32,
                            block_m=block_m, block_n=block_n)

    out = out.reshape(N, Ho, Wo, c4_p)[..., :C4]
    return jnp.transpose(out, (0, 3, 1, 2))   # NHWC -> NCHW


def init_params(key, in_planes, planes, stride, expansion=4):
    keys = jax.random.split(key, 8)

    def conv_w(k, cout, cin, kh, kw):
        return jax.random.normal(k, (cout, cin, kh, kw), jnp.float32) * 0.2

    def bn_p(k, c):
        k1, k2, k3, k4 = jax.random.split(k, 4)
        gamma = 0.5 + jax.random.uniform(k1, (c,), jnp.float32)
        beta = jax.random.normal(k2, (c,), jnp.float32) * 0.1
        rmean = jax.random.normal(k3, (c,), jnp.float32) * 0.1
        rvar = 0.5 + jax.random.uniform(k4, (c,), jnp.float32)
        return (gamma, beta, rmean, rvar)

    p = {
        "w1": conv_w(keys[0], planes, in_planes, 1, 1),
        "bn1": bn_p(keys[1], planes),
        "w2": conv_w(keys[2], planes, planes, 3, 3),
        "bn2": bn_p(keys[3], planes),
        "w3": conv_w(keys[4], expansion * planes, planes, 1, 1),
        "bn3": bn_p(keys[5], expansion * planes),
    }
    if stride != 1 or in_planes != expansion * planes:
        p["w_sc"] = conv_w(keys[6], expansion * planes, in_planes, 1, 1)
        p["bn_sc"] = bn_p(keys[7], expansion * planes)
    return p


# ----------------------------------------------------------------------------
# Pure-JAX reference (mirrors the PyTorch eval-mode forward) for verification
# ----------------------------------------------------------------------------
def bottleneck_ref(x, p, *, stride=1, eps=1e-5):
    def conv(x, w, s, pad):
        return jax.lax.conv_general_dilated(
            x, w, (s, s), [(pad, pad), (pad, pad)],
            dimension_numbers=("NCHW", "OIHW", "NCHW"),
        )

    def bn(x, prm):
        g, b, m, v = prm
        inv = (g / jnp.sqrt(v + eps))[None, :, None, None]
        return (x - m[None, :, None, None]) * inv + b[None, :, None, None]

    out = jax.nn.relu(bn(conv(x, p["w1"], 1, 0), p["bn1"]))
    out = jax.nn.relu(bn(conv(out, p["w2"], stride, 1), p["bn2"]))
    out = bn(conv(out, p["w3"], 1, 0), p["bn3"])
    if "w_sc" in p:
        sc = bn(conv(x, p["w_sc"], stride, 0), p["bn_sc"])
    else:
        sc = x
    return jax.nn.relu(out + sc)


if __name__ == "__main__":
    key = jax.random.PRNGKey(0)

    # (in_planes, planes, stride, N, H, W, block_m)
    configs = [
        (8, 4, 1, 2, 16, 16, 128),   # conv shortcut; block_m=128 exercises M tiling
        (16, 4, 1, 2, 16, 16, 512),  # identity shortcut (f32 residual path)
        (16, 4, 2, 2, 16, 16, 512),  # stride-2 block with fused conv shortcut
    ]

    for idx, (in_planes, planes, stride, N, H, W, block_m) in enumerate(configs):
        k_param, k_x, key = jax.random.split(key, 3)
        params = init_params(k_param, in_planes, planes, stride)
        x = jax.random.normal(k_x, (N, in_planes, H, W), jnp.float32)

        ref = bottleneck_ref(x, params, stride=stride)

        # f32 path: strict check against the PyTorch-style reference.
        out32 = jax.block_until_ready(
            bottleneck_forward(x, params, stride=stride,
                               compute_dtype=jnp.float32, block_m=block_m))
        assert out32.shape == ref.shape, (idx, out32.shape, ref.shape)
        err32 = float(jnp.max(jnp.abs(out32 - ref)))
        assert jnp.allclose(out32, ref, rtol=2e-2, atol=2e-2), (
            "config %d f32 max abs diff = %f" % (idx, err32))

        # bf16 path (default perf configuration): looser tolerance.
        out16 = jax.block_until_ready(
            bottleneck_forward(x, params, stride=stride,
                               compute_dtype=jnp.bfloat16, block_m=block_m))
        err16 = float(jnp.max(jnp.abs(out16 - ref)))
        assert jnp.allclose(out16, ref, rtol=1e-1, atol=2.5e-1), (
            "config %d bf16 max abs diff = %f" % (idx, err16))

    print("KERNEL_OK")
</pallas_src>

<mosaic_0001>
module attributes {stable_mosaic.version = 11 : i64} {
  func.func @kernel(%arg0: i32, %arg1: i32, %arg2: memref<128x128xf32, #tpu.memory_space<vmem>>, %arg3: memref<128x128xf32, #tpu.memory_space<vmem>>, %arg4: memref<1x128xf32, #tpu.memory_space<vmem>>, %arg5: memref<128x128xf32, #tpu.memory_space<vmem>>) attributes {dimension_semantics = [#tpu.dimension_semantics<parallel>, #tpu.dimension_semantics<parallel>], iteration_bounds = array<i64: 4, 1>, scalar_prefetch = 0 : i64, scratch_operands = 0 : i64, tpu.core_type = #tpu.core_type<tc>, window_params = [{transform_indices = @transform_0, window_bounds = array<i64: 128, 128>}, {transform_indices = @transform_1, window_bounds = array<i64: 128, 128>}, {transform_indices = @transform_2, window_bounds = array<i64: 1, 128>}, {transform_indices = @transform_3, window_bounds = array<i64: 128, 128>}]} {
    %c0 = arith.constant 0 : index
    %c0_0 = arith.constant 0 : index
    %0 = vector.load %arg2[%c0, %c0_0] : memref<128x128xf32, #tpu.memory_space<vmem>>, vector<128x128xf32>
    %c0_1 = arith.constant 0 : index
    %c0_2 = arith.constant 0 : index
    %1 = vector.load %arg3[%c0_1, %c0_2] : memref<128x128xf32, #tpu.memory_space<vmem>>, vector<128x128xf32>
    %cst = arith.constant dense<0.000000e+00> : vector<128x128xf32>
    %2 = tpu.matmul %0, %1, %cst {dimension_numbers = #tpu.dot_dimension_numbers<[1], [0], [0], [1], [0, 0, 1, 1], [], []>} : vector<128x128xf32>, vector<128x128xf32>, vector<128x128xf32> -> vector<128x128xf32>
    %c0_3 = arith.constant 0 : index
    %c0_4 = arith.constant 0 : index
    %3 = vector.load %arg4[%c0_3, %c0_4] : memref<1x128xf32, #tpu.memory_space<vmem>>, vector<1x128xf32>
    %4 = vector.broadcast %3 : vector<1x128xf32> to vector<128x128xf32>
    %5 = arith.addf %2, %4 : vector<128x128xf32>
    %cst_5 = arith.constant 0.000000e+00 : f32
    %6 = vector.broadcast %cst_5 : f32 to vector<128x128xf32>
    %7 = arith.maximumf %5, %6 : vector<128x128xf32>
    %c0_6 = arith.constant 0 : index
    %c0_7 = arith.constant 0 : index
    %8 = vector.load %arg5[%c0_6, %c0_7] : memref<128x128xf32, #tpu.memory_space<vmem>>, vector<128x128xf32>
    tpu.vector_store %arg5[%c0_6, %c0_7], %7 {strides = array<i32>} : memref<128x128xf32, #tpu.memory_space<vmem>>, vector<128x128xf32>,
    return
  }
  func.func @transform_0(%arg0: i32, %arg1: i32) -> (i32, i32) {
    %c0_i32 = arith.constant 0 : i32
    %c0_i32_0 = arith.constant 0 : i32
    return %arg0, %c0_i32 : i32, i32
  }
  func.func @transform_1(%arg0: i32, %arg1: i32) -> (i32, i32) {
    %c0_i32 = arith.constant 0 : i32
    %c0_i32_0 = arith.constant 0 : i32
    return %c0_i32, %arg1 : i32, i32
  }
  func.func @transform_2(%arg0: i32, %arg1: i32) -> (i32, i32) {
    %c0_i32 = arith.constant 0 : i32
    %c0_i32_0 = arith.constant 0 : i32
    return %c0_i32, %arg1 : i32, i32
  }
  func.func @transform_3(%arg0: i32, %arg1: i32) -> (i32, i32) {
    %c0_i32 = arith.constant 0 : i32
    return %arg0, %arg1 : i32, i32
  }
}

</mosaic_0001>

<llo_original>
// kernel: tpu_custom_call.1
$region0: #{tpu_custom_call.1}
  #allocation0 [shape = 'u32[]', space=smem, size = 0x4, offset = 0x4, fixed_abs, tag = 'smem constant byte address 0x4 - core index']
  #allocation1 [shape = 'u32[144,128]{1,0:T(1,128)}', space=vmem, size = 0x12000, scoped, tag = 'internal scratch']
  %s0 = inlined_call_operand.hbm [shape: f32[512,128], index: 0, kind: input, shape index: {}]
  %s1 = inlined_call_operand.hbm [shape: f32[128,128], index: 1, kind: input, shape index: {}]
  %s2 = inlined_call_operand.vmem [shape: f32[1,128], index: 2, kind: input, shape index: {}]
  %s3 = inlined_call_operand.hbm [shape: f32[512,128], index: 3, kind: output, shape index: {}]
  %s4 = sld [smem:[#allocation0]]
  $region53: #{tpu_custom_call.1} parent=0
    _
  %s6 = ssub.s32 1, %s4
  %s7 = scalar_select 0, %s6, %s4
  $region1: #{tpu_custom_call.1} parent=0
    #allocation2 [shape = 'u8[131072]{0}', space=vmem, size = 0x20000, scoped, tag = 'input window, operand 0']
    #allocation3 [shape = 's32[2]{0}', space=sflag, size = 0x8, scoped, tag = 'scoped memory for tpu_custom_call.1']
    #allocation4 [shape = 's32[2]{0}', space=sflag, size = 0x8, scoped, tag = 'scoped memory for tpu_custom_call.1']
    #allocation5 [shape = 'u8[65536]{0}', space=vmem, size = 0x10000, scoped, tag = 'input window, operand 1, single buffered']
    #allocation6 [shape = 's32[1]{0}', space=sflag, size = 0x4, scoped, tag = 'scoped memory for tpu_custom_call.1']
    #allocation7 [shape = 'u8[131072]{0}', space=vmem, size = 0x20000, scoped, tag = 'output window, operand 0']
    %8 = vsyncpa [#allocation3], 0
    %s9 = scalar_lea.sflag [#allocation3], 1
    %10 = vsyncpa %s9, 0
    %11 = vsyncpa [#allocation6], 0
    %12 = vsyncpa [#allocation4], 0
    %s13 = scalar_lea.sflag [#allocation4], 1
    %14 = vsyncpa %s13, 0
    loop: start=0, step=1, limit=6
    $region2: #{tpu_custom_call.1} parent=1 // loop_pre_header
      _
    $region3: #{tpu_custom_call.1} parent=1 // loop_header
      %s16 = sphi 0, %s20
      %p17 = scmp.ge.s32.totalorder %s16, 6
      %s23 = sphi 0, %s35
      %s24 = sphi 0, %s31
      %s25 = sphi 0, %s23
      %s26 = sphi 0, %s24
      %s27 = sphi 0, %s25
      %s28 = sphi 0, %s26
      %s38 = sphi 0, %s40
      %s41 = sphi 0, %s38
      %s42 = sphi 0, %s41
      %s58 = sphi 0, %s42
      %s64 = sphi 0, %s66
      %s67 = sphi 0, %s64
      %s68 = sphi 0, %s67
      %s84 = sphi 0, %s68
      %s90 = sphi 0, %s92
      %s93 = sphi 0, %s90
      %s94 = sphi 0, %s93
      %s110 = sphi 0, %s94
      %s118 = sphi 0, %s120
      %s121 = sphi 0, %s118
      %s122 = sphi 0, %s121
      %s138 = sphi 0, %s122
    $region4: #{tpu_custom_call.1} parent=1 // loop_header_branch
      %19 = sbr.rel (%p17) target = $region8
    $region5: #{tpu_custom_call.1} parent=1 // loop_body
      %s21 = ssub.s32 %s16, 1
      %s22 = ssub.s32 %s16, 2
      %s29 = sadd.s32 1, %s24
      %p30 = scmp.ge.s32.totalorder %s29, 1
      %s31 = scalar_select %p30, 0, %s29
      %s32 = sadd.s32 1, %s23
      %s33 = scalar_select %p30, %s32, %s23
      %p34 = scmp.ge.s32.totalorder %s33, 4
      %s35 = scalar_select %p34, 0, %s33
      %s36 = ssub.s32 %s23, %s35
      %p37 = scmp.eq.s32.totalorder %s36, 0
      %s39 = sadd.s32 %s38, 1
      %s40 = scalar_select %p37, %s38, %s39
      %p43 = pneg %p37
      %p44 = scmp.eq.s32.totalorder %s16, 3
      %p45 = por %p43, %p44
      %p46 = scmp.ne.s32.totalorder %s38, %s41
      %p47 = scmp.eq.s32.totalorder %s16, 0
      %p48 = por %p46, %p47
      %p49 = scmp.ne.s32.totalorder %s38, %s41
      %p50 = scmp.eq.s32.totalorder %s21, 3
      %p51 = por %p49, %p50
      %p52 = scmp.ne.s32.totalorder %s41, %s42
      %p53 = scmp.eq.s32.totalorder %s21, 0
      %p54 = por %p52, %p53
      %p55 = scmp.ne.s32.totalorder %s41, %s42
      %p56 = scmp.eq.s32.totalorder %s22, 3
      %p57 = por %p55, %p56
      %p59 = scmp.ne.s32.totalorder %s42, %s58
      %p60 = scmp.eq.s32.totalorder %s22, 0
      %p61 = por %p59, %p60
      %s62 = ssub.s32 %s24, %s31
      %p63 = scmp.eq.s32.totalorder %s62, 0
      %s65 = sadd.s32 %s64, 1
      %s66 = scalar_select %p63, %s64, %s65
      %p69 = pneg %p63
      %p70 = scmp.eq.s32.totalorder %s16, 3
      %p71 = por %p69, %p70
      %p72 = scmp.ne.s32.totalorder %s64, %s67
      %p73 = scmp.eq.s32.totalorder %s16, 0
      %p74 = por %p72, %p73
      %p75 = scmp.ne.s32.totalorder %s64, %s67
      %p76 = scmp.eq.s32.totalorder %s21, 3
      %p77 = por %p75, %p76
      %p78 = scmp.ne.s32.totalorder %s67, %s68
      %p79 = scmp.eq.s32.totalorder %s21, 0
      %p80 = por %p78, %p79
      %p81 = scmp.ne.s32.totalorder %s67, %s68
      %p82 = scmp.eq.s32.totalorder %s22, 3
      %p83 = por %p81, %p82
      %p85 = scmp.ne.s32.totalorder %s68, %s84
      %p86 = scmp.eq.s32.totalorder %s22, 0
      %p87 = por %p85, %p86
      %s88 = ssub.s32 %s24, %s31
      %p89 = scmp.eq.s32.totalorder %s88, 0
      %s91 = sadd.s32 %s90, 1
      %s92 = scalar_select %p89, %s90, %s91
      %p95 = pneg %p89
      %p96 = scmp.eq.s32.totalorder %s16, 3
      %p97 = por %p95, %p96
      %p98 = scmp.ne.s32.totalorder %s90, %s93
      %p99 = scmp.eq.s32.totalorder %s16, 0
      %p100 = por %p98, %p99
      %p101 = scmp.ne.s32.totalorder %s90, %s93
      %p102 = scmp.eq.s32.totalorder %s21, 3
      %p103 = por %p101, %p102
      %p104 = scmp.ne.s32.totalorder %s93, %s94
      %p105 = scmp.eq.s32.totalorder %s21, 0
      %p106 = por %p104, %p105
      %p107 = scmp.ne.s32.totalorder %s93, %s94
      %p108 = scmp.eq.s32.totalorder %s22, 3
      %p109 = por %p107, %p108
      %p111 = scmp.ne.s32.totalorder %s94, %s110
      %p112 = scmp.eq.s32.totalorder %s22, 0
      %p113 = por %p111, %p112
      %s114 = ssub.s32 %s23, %s35
      %s115 = ssub.s32 %s24, %s31
      %s116 = sor.u32 %s114, %s115
      %p117 = scmp.eq.s32.totalorder %s116, 0
      %s119 = sadd.s32 %s118, 1
      %s120 = scalar_select %p117, %s118, %s119
      %p123 = pneg %p117
      %p124 = scmp.eq.s32.totalorder %s16, 3
      %p125 = por %p123, %p124
      %p126 = scmp.ne.s32.totalorder %s118, %s121
      %p127 = scmp.eq.s32.totalorder %s16, 0
      %p128 = por %p126, %p127
      %p129 = scmp.ne.s32.totalorder %s118, %s121
      %p130 = scmp.eq.s32.totalorder %s21, 3
      %p131 = por %p129, %p130
      %p132 = scmp.ne.s32.totalorder %s121, %s122
      %p133 = scmp.eq.s32.totalorder %s21, 0
      %p134 = por %p132, %p133
      %p135 = scmp.ne.s32.totalorder %s121, %s122
      %p136 = scmp.eq.s32.totalorder %s22, 3
      %p137 = por %p135, %p136
      %p139 = scmp.ne.s32.totalorder %s122, %s138
      %p140 = scmp.eq.s32.totalorder %s22, 0
      %p141 = por %p139, %p140
      %p142 = scmp.le.s32.totalorder 1, %s16
      %p143 = scmp.lt.s32.totalorder %s16, 5
      %p144 = pnand %p142, %p143
      %p145 = pneg %p144
      // Predicated region
      $region9: #{tpu_custom_call.1} parent=5 // pred_check
        _
      $region10: #{tpu_custom_call.1} parent=5 // pred_check_branch
        %147 = sbr.rel (%p144) target = $region12
      $region11: #{tpu_custom_call.1} parent=5 // pred_region
        %s148 = ssub.s32 %s16, 1
        // Predicated region
        $region13: #{tpu_custom_call.1} parent=11 // pred_check
          %p149 = pneg %p80
        $region14: #{tpu_custom_call.1} parent=11 // pred_check_branch
          %151 = sbr.rel (%p149) target = $region16
        $region15: #{tpu_custom_call.1} parent=11 // pred_region
          %s153 = ssub.s32 2048, 2048
          %154 = vsyncadd [#allocation6], %s153
          %s155 = smul.addr %s26, 128
          %s156 = scalar_lea.hbm %s1, %s155
          %s157 = sshll.u32 [#allocation5], 4
          %s158 = int_to_ptr.vmem [resolvable:$true] %s157
          %163 = dma.hbm_to_vmem [thread:$0]  %s156, 2048, %s158, [#allocation6], 128, 128, 8
        $region16: #{tpu_custom_call.1} parent=11 // pred_fallthru
          _
        // Predicated region
        $region17: #{tpu_custom_call.1} parent=11 // pred_check
          %p164 = pneg %p106
        $region18: #{tpu_custom_call.1} parent=11 // pred_check_branch
          %166 = sbr.rel (%p164) target = $region20
        $region19: #{tpu_custom_call.1} parent=11 // pred_region
          %p167 = scmp.lt.s32.totalorder %s26, 0
          %s168 = scalar_select %p167, %s26, 0
          %s169 = scalar_lea.vmem %s2, %s168
        $region20: #{tpu_custom_call.1} parent=11 // pred_fallthru
          _
      $region12: #{tpu_custom_call.1} parent=5 // pred_fallthru
        _
      %p170 = scmp.lt.s32.totalorder %s16, 4
      // Predicated region
      $region21: #{tpu_custom_call.1} parent=5 // pred_check
        %p171 = pneg %p170
      $region22: #{tpu_custom_call.1} parent=5 // pred_check_branch
        %173 = sbr.rel (%p171) target = $region24
      $region23: #{tpu_custom_call.1} parent=5 // pred_region
        // Predicated region
        $region25: #{tpu_custom_call.1} parent=23 // pred_check
          %p174 = pneg %p48
        $region26: #{tpu_custom_call.1} parent=23 // pred_check_branch
          %176 = sbr.rel (%p174) target = $region28
        $region27: #{tpu_custom_call.1} parent=23 // pred_region
          %s177 = sand.u32 %s38, 1
          %s178 = scalar_lea.sflag [#allocation3], %s177
          %s179 = sand.u32 %s38, 1
          %s180 = smul.addr %s179, 128
          %s181 = scalar_lea.vmem [#allocation2], %s180
          %s182 = smul.u32 16, %s23
          %s184 = ssub.s32 2048, 2048
          %185 = vsyncadd %s178, %s184
          %s186 = smul.addr %s182, 128
          %s187 = scalar_lea.hbm %s0, %s186
          %s188 = sshll.u32 %s181, 4
          %s189 = int_to_ptr.vmem [resolvable:$true] %s188
          %194 = dma.hbm_to_vmem [thread:$0]  %s187, 2048, %s189, %s178, 128, 128, 8
        $region28: #{tpu_custom_call.1} parent=23 // pred_fallthru
          _
      $region24: #{tpu_custom_call.1} parent=5 // pred_fallthru
        _
      %p195 = scmp.le.s32.totalorder 1, %s16
      %p196 = scmp.lt.s32.totalorder %s16, 5
      %p197 = pnand %p195, %p196
      %p198 = pneg %p197
      // Predicated region
      $region29: #{tpu_custom_call.1} parent=5 // pred_check
        _
      $region30: #{tpu_custom_call.1} parent=5 // pred_check_branch
        %200 = sbr.rel (%p197) target = $region32
      $region31: #{tpu_custom_call.1} parent=5 // pred_region
        %s201 = ssub.s32 %s16, 1
        %s202 = sand.u32 %s41, 1
        %s203 = scalar_lea.sflag [#allocation3], %s202
        %s204 = sand.u32 %s41, 1
        %s205 = smul.addr %s204, 128
        %s206 = scalar_lea.vmem [#allocation2], %s205
        // Predicated region
        $region33: #{tpu_custom_call.1} parent=31 // pred_check
          %p207 = pneg %p54
        $region34: #{tpu_custom_call.1} parent=31 // pred_check_branch
          %209 = sbr.rel (%p207) target = $region36
        $region35: #{tpu_custom_call.1} parent=31 // pred_region
          %210 = dma.done %s203, 2048
        $region36: #{tpu_custom_call.1} parent=31 // pred_fallthru
          _
        // Predicated region
        $region37: #{tpu_custom_call.1} parent=31 // pred_check
          %p211 = pneg %p80
        $region38: #{tpu_custom_call.1} parent=31 // pred_check_branch
          %213 = sbr.rel (%p211) target = $region40
        $region39: #{tpu_custom_call.1} parent=31 // pred_region
          %214 = dma.done [#allocation6], 2048
        $region40: #{tpu_custom_call.1} parent=31 // pred_fallthru
          _
        %s215 = sand.u32 %s41, 1
        %s216 = scalar_lea.sflag [#allocation3], %s215
        %s217 = sand.u32 %s41, 1
        %s218 = smul.addr %s217, 128
        %s219 = scalar_lea.vmem [#allocation2], %s218
        %p220 = pneg %p54
        %p221 = pneg %p51
        %p222 = pneg %p80
        %p223 = pneg %p77
        %p224 = scmp.lt.s32.totalorder %s26, 0
        %s225 = scalar_select %p224, %s26, 0
        %s226 = scalar_lea.vmem %s2, %s225
        %p227 = pneg %p106
        %p228 = pneg %p103
        %p229 = pneg %p134
        %p230 = pneg %p131
        %s231 = sand.u32 %s121, 1
        %s232 = scalar_lea.sflag [#allocation4], %s231
        %s233 = sand.u32 %s121, 1
        %s234 = smul.addr %s233, 128
        %s235 = scalar_lea.vmem [#allocation7], %s234
        %s236 = smul.u32 16, %s25
        %p237 = scmp.lt.s32.totalorder %s26, 0
        %s238 = scalar_select %p237, %s26, 0
        %s239 = scalar_lea.vmem %s2, %s238
        %s240 = smul.u32 16, %s25
        %v241 = vld [vmem:[%s206] sm:$0xff]
        %v242 = vld [vmem:[%s206 + $0x8] sm:$0xff]
        %v243 = vld [vmem:[%s206 + $0x10] sm:$0xff]
        %v244 = vld [vmem:[%s206 + $0x18] sm:$0xff]
        %v245 = vld [vmem:[%s206 + $0x20] sm:$0xff]
        %v246 = vld [vmem:[%s206 + $0x28] sm:$0xff]
        %v247 = vld [vmem:[%s206 + $0x30] sm:$0xff]
        %v248 = vld [vmem:[%s206 + $0x38] sm:$0xff]
        %v249 = vld [vmem:[%s206 + $0x40] sm:$0xff]
        %v250 = vld [vmem:[%s206 + $0x48] sm:$0xff]
        %v251 = vld [vmem:[%s206 + $0x50] sm:$0xff]
        %v252 = vld [vmem:[%s206 + $0x58] sm:$0xff]
        %v253 = vld [vmem:[%s206 + $0x60] sm:$0xff]
        %v254 = vld [vmem:[%s206 + $0x68] sm:$0xff]
        %v255 = vld [vmem:[%s206 + $0x70] sm:$0xff]
        %v256 = vld [vmem:[%s206 + $0x78] sm:$0xff]
        %v257 = vld [vmem:[#allocation5] sm:$0xff]
        %v258 = vld [vmem:[#allocation5 + $0x8] sm:$0xff]
        %v259 = vld [vmem:[#allocation5 + $0x10] sm:$0xff]
        %v260 = vld [vmem:[#allocation5 + $0x18] sm:$0xff]
        %v261 = vld [vmem:[#allocation5 + $0x20] sm:$0xff]
        %v262 = vld [vmem:[#allocation5 + $0x28] sm:$0xff]
        %v263 = vld [vmem:[#allocation5 + $0x30] sm:$0xff]
        %v264 = vld [vmem:[#allocation5 + $0x38] sm:$0xff]
        %v265 = vld [vmem:[#allocation5 + $0x40] sm:$0xff]
        %v266 = vld [vmem:[#allocation5 + $0x48] sm:$0xff]
        %v267 = vld [vmem:[#allocation5 + $0x50] sm:$0xff]
        %v268 = vld [vmem:[#allocation5 + $0x58] sm:$0xff]
        %v269 = vld [vmem:[#allocation5 + $0x60] sm:$0xff]
        %v270 = vld [vmem:[#allocation5 + $0x68] sm:$0xff]
        %v271 = vld [vmem:[#allocation5 + $0x70] sm:$0xff]
        %v272 = vld [vmem:[#allocation5 + $0x78] sm:$0xff]
        %v273 = vld [vmem:[%s239] sm:$0x1]
        %v275 = vlaneseq
        %v276 = vshrl.u32 %v275, 7
        %v277 = vsub.s32 0, %v276
        %v278 = vrot.slane %v273, %v277
        %280 = vmatprep.subr.mxu0 0.0
        %281 = vmatpush1.msra.mxu0 %v257
        %282 = vmatprep.subr.mxu0 0.0
        %283 = vmatpush1.msra.mxu0 %v258
        %284 = vmatprep.subr.mxu0 0.0
        %285 = vmatpush1.msra.mxu0 %v259
        %286 = vmatprep.subr.mxu0 0.0
        %287 = vmatpush1.msra.mxu0 %v260
        %288 = vmatprep.subr.mxu0 0.0
        %289 = vmatpush1.msra.mxu0 %v261
        %290 = vmatprep.subr.mxu0 0.0
        %291 = vmatpush1.msra.mxu0 %v262
        %292 = vmatprep.subr.mxu0 0.0
        %293 = vmatpush1.msra.mxu0 %v263
        %294 = vmatprep.subr.mxu0 0.0
        %295 = vmatpush1.msra.mxu0 %v264
        %296 = vmatprep.subr.mxu0 0.0
        %297 = vmatpush1.msra.mxu0 %v265
        %298 = vmatprep.subr.mxu0 0.0
        %299 = vmatpush1.msra.mxu0 %v266
        %300 = vmatprep.subr.mxu0 0.0
        %301 = vmatpush1.msra.mxu0 %v267
        %302 = vmatprep.subr.mxu0 0.0
        %303 = vmatpush1.msra.mxu0 %v268
        %304 = vmatprep.subr.mxu0 0.0
        %305 = vmatpush1.msra.mxu0 %v269
        %306 = vmatprep.subr.mxu0 0.0
        %307 = vmatpush1.msra.mxu0 %v270
        %308 = vmatprep.subr.mxu0 0.0
        %309 = vmatpush1.msra.mxu0 %v271
        %310 = vmatprep.subr.mxu0 0.0
        %311 = vmatpush1.msra.mxu0 %v272
        %312 = vmatprep.subr.mxu0 0.0
        %313 = vmatpush1.msra.mxu0 0.0
        %314 = vmatprep.subr.mxu0 0.0
        %315 = vmatpush1.msra.mxu0 0.0
        %316 = vmatprep.subr.mxu0 0.0
        %317 = vmatpush1.msra.mxu0 0.0
        %318 = vmatprep.subr.mxu0 0.0
        %319 = vmatpush1.msra.mxu0 0.0
        %320 = vmatprep.subr.mxu0 0.0
        %321 = vmatpush1.msra.mxu0 0.0
        %322 = vmatprep.subr.mxu0 0.0
        %323 = vmatpush1.msra.mxu0 0.0
        %324 = vmatprep.subr.mxu0 0.0
        %325 = vmatpush1.msra.mxu0 0.0
        %326 = vmatprep.subr.mxu0 0.0
        %327 = vmatpush1.msra.mxu0 0.0
        %328 = vmatprep.subr.mxu0 0.0
        %329 = vmatpush1.msra.mxu0 0.0
        %330 = vmatprep.subr.mxu0 0.0
        %331 = vmatpush1.msra.mxu0 0.0
        %332 = vmatprep.subr.mxu0 0.0
        %333 = vmatpush1.msra.mxu0 0.0
        %334 = vmatprep.subr.mxu0 0.0
        %335 = vmatpush1.msra.mxu0 0.0
        %336 = vmatprep.subr.mxu0 0.0
        %337 = vmatpush1.msra.mxu0 0.0
        %338 = vmatprep.subr.mxu0 0.0
        %339 = vmatpush1.msra.mxu0 0.0
        %340 = vmatprep.subr.mxu0 0.0
        %341 = vmatpush1.msra.mxu0 0.0
        %342 = vmatprep.subr.mxu0 0.0
        %343 = vmatpush1.msra.mxu0 0.0
        %344 = vmatprep.mubr.f32.mxu0 0.0
        %345 = vmatmul.mubr.f32.gmra.mrb[0].mxu0 %v241
        %v346 = vpop.f32.mrb[0].mxu0
        %v347 = vadd.f32 %v278, %v346
        %v348 = vpop.f32.mrb[0].mxu0
        %349 = vmatprep.mubr.f32.mxu0 0.0
        %350 = vmatmul.mubr.f32.gmra.mrb[0].mxu0 %v242
        %v351 = vpop.f32.mrb[0].mxu0
        %v352 = vadd.f32 %v278, %v351
        %v353 = vpop.f32.mrb[0].mxu0
        %354 = vmatprep.mubr.f32.mxu0 0.0
        %355 = vmatmul.mubr.f32.gmra.mrb[0].mxu0 %v243
        %v356 = vpop.f32.mrb[0].mxu0
        %v357 = vadd.f32 %v278, %v356
        %v358 = vpop.f32.mrb[0].mxu0
        %359 = vmatprep.mubr.f32.mxu0 0.0
        %360 = vmatmul.mubr.f32.gmra.mrb[0].mxu0 %v244
        %v361 = vpop.f32.mrb[0].mxu0
        %v362 = vadd.f32 %v278, %v361
        %v363 = vpop.f32.mrb[0].mxu0
        %364 = vmatprep.mubr.f32.mxu0 0.0
        %365 = vmatmul.mubr.f32.gmra.mrb[0].mxu0 %v245
        %v366 = vpop.f32.mrb[0].mxu0
        %v367 = vadd.f32 %v278, %v366
        %v368 = vpop.f32.mrb[0].mxu0
        %369 = vmatprep.mubr.f32.mxu0 0.0
        %370 = vmatmul.mubr.f32.gmra.mrb[0].mxu0 %v246
        %v371 = vpop.f32.mrb[0].mxu0
        %v372 = vadd.f32 %v278, %v371
        %v373 = vpop.f32.mrb[0].mxu0
        %374 = vmatprep.mubr.f32.mxu0 0.0
        %375 = vmatmul.mubr.f32.gmra.mrb[0].mxu0 %v247
        %v376 = vpop.f32.mrb[0].mxu0
        %v377 = vadd.f32 %v278, %v376
        %v378 = vpop.f32.mrb[0].mxu0
        %379 = vmatprep.mubr.f32.mxu0 0.0
        %380 = vmatmul.mubr.f32.gmra.mrb[0].mxu0 %v248
        %v381 = vpop.f32.mrb[0].mxu0
        %v382 = vadd.f32 %v278, %v381
        %v383 = vpop.f32.mrb[0].mxu0
        %384 = vmatprep.mubr.f32.mxu0 0.0
        %385 = vmatmul.mubr.f32.gmra.mrb[0].mxu0 %v249
        %v386 = vpop.f32.mrb[0].mxu0
        %v387 = vadd.f32 %v278, %v386
        %v388 = vpop.f32.mrb[0].mxu0
        %389 = vmatprep.mubr.f32.mxu0 0.0
        %390 = vmatmul.mubr.f32.gmra.mrb[0].mxu0 %v250
        %v391 = vpop.f32.mrb[0].mxu0
        %v392 = vadd.f32 %v278, %v391
        %v393 = vpop.f32.mrb[0].mxu0
        %394 = vmatprep.mubr.f32.mxu0 0.0
        %395 = vmatmul.mubr.f32.gmra.mrb[0].mxu0 %v251
        %v396 = vpop.f32.mrb[0].mxu0
        %v397 = vadd.f32 %v278, %v396
        %v398 = vpop.f32.mrb[0].mxu0
        %399 = vmatprep.mubr.f32.mxu0 0.0
        %400 = vmatmul.mubr.f32.gmra.mrb[0].mxu0 %v252
        %v401 = vpop.f32.mrb[0].mxu0
        %v402 = vadd.f32 %v278, %v401
        %v403 = vpop.f32.mrb[0].mxu0
        %404 = vmatprep.mubr.f32.mxu0 0.0
        %405 = vmatmul.mubr.f32.gmra.mrb[0].mxu0 %v253
        %v406 = vpop.f32.mrb[0].mxu0
        %v407 = vadd.f32 %v278, %v406
        %v408 = vpop.f32.mrb[0].mxu0
        %409 = vmatprep.mubr.f32.mxu0 0.0
        %410 = vmatmul.mubr.f32.gmra.mrb[0].mxu0 %v254
        %v411 = vpop.f32.mrb[0].mxu0
        %v412 = vadd.f32 %v278, %v411
        %v413 = vpop.f32.mrb[0].mxu0
        %414 = vmatprep.mubr.f32.mxu0 0.0
        %415 = vmatmul.mubr.f32.gmra.mrb[0].mxu0 %v255
        %v416 = vpop.f32.mrb[0].mxu0
        %v417 = vadd.f32 %v278, %v416
        %v418 = vpop.f32.mrb[0].mxu0
        %419 = vmatprep.mubr.f32.mxu0 0.0
        %420 = vmatmul.mubr.f32.gmra.mrb[0].mxu0 %v256
        %v421 = vpop.f32.mrb[0].mxu0
        %v422 = vadd.f32 %v278, %v421
        %v423 = vpop.f32.mrb[0].mxu0
        %424 = vdwg.mxu0
        %v425 = vmax.f32 %v347, 0.0
        %v426 = vmax.f32 %v352, 0.0
        %v427 = vmax.f32 %v357, 0.0
        %v428 = vmax.f32 %v362, 0.0
        %v429 = vmax.f32 %v367, 0.0
        %v430 = vmax.f32 %v372, 0.0
        %v431 = vmax.f32 %v377, 0.0
        %v432 = vmax.f32 %v382, 0.0
        %v433 = vmax.f32 %v387, 0.0
        %v434 = vmax.f32 %v392, 0.0
        %v435 = vmax.f32 %v397, 0.0
        %v436 = vmax.f32 %v402, 0.0
        %v437 = vmax.f32 %v407, 0.0
        %v438 = vmax.f32 %v412, 0.0
        %v439 = vmax.f32 %v417, 0.0
        %v440 = vmax.f32 %v422, 0.0
        %441 = vst [vmem:[%s235] sm:$0xff] %v425
        %442 = vst [vmem:[%s235 + $0x8] sm:$0xff] %v426
        %443 = vst [vmem:[%s235 + $0x10] sm:$0xff] %v427
        %444 = vst [vmem:[%s235 + $0x18] sm:$0xff] %v428
        %445 = vst [vmem:[%s235 + $0x20] sm:$0xff] %v429
        %446 = vst [vmem:[%s235 + $0x28] sm:$0xff] %v430
        %447 = vst [vmem:[%s235 + $0x30] sm:$0xff] %v431
        %448 = vst [vmem:[%s235 + $0x38] sm:$0xff] %v432
        %449 = vst [vmem:[%s235 + $0x40] sm:$0xff] %v433
        %450 = vst [vmem:[%s235 + $0x48] sm:$0xff] %v434
        %451 = vst [vmem:[%s235 + $0x50] sm:$0xff] %v435
        %452 = vst [vmem:[%s235 + $0x58] sm:$0xff] %v436
        %453 = vst [vmem:[%s235 + $0x60] sm:$0xff] %v437
        %454 = vst [vmem:[%s235 + $0x68] sm:$0xff] %v438
        %455 = vst [vmem:[%s235 + $0x70] sm:$0xff] %v439
        %456 = vst [vmem:[%s235 + $0x78] sm:$0xff] %v440
        %s457 = sand.u32 %s121, 1
        %s458 = scalar_lea.sflag [#allocation4], %s457
        %s459 = sand.u32 %s121, 1
        %s460 = smul.addr %s459, 128
        %s461 = scalar_lea.vmem [#allocation7], %s460
        // Predicated region
        $region41: #{tpu_custom_call.1} parent=31 // pred_check
          %p462 = pneg %p131
        $region42: #{tpu_custom_call.1} parent=31 // pred_check_branch
          %464 = sbr.rel (%p462) target = $region44
        $region43: #{tpu_custom_call.1} parent=31 // pred_region
          %s465 = smul.u32 16, %s25
          %s467 = ssub.s32 2048, 2048
          %468 = vsyncadd %s458, %s467
          %s469 = sadd.s32 %s26, %s465
          %s470 = smul.addr %s469, 128
          %s471 = scalar_lea.hbm %s3, %s470
          %s472 = sshll.u32 %s461, 4
          %s473 = int_to_ptr.vmem [resolvable:$true] %s472
          %478 = dma.vmem_to_hbm [thread:$0]  %s473, 2048, %s471, %s458, 128, 128, 8
        $region44: #{tpu_custom_call.1} parent=31 // pred_fallthru
          _
      $region32: #{tpu_custom_call.1} parent=5 // pred_fallthru
        _
      %p479 = scmp.le.s32.totalorder 2, %s16
      // Predicated region
      $region45: #{tpu_custom_call.1} parent=5 // pred_check
        %p480 = pneg %p479
      $region46: #{tpu_custom_call.1} parent=5 // pred_check_branch
        %482 = sbr.rel (%p480) target = $region48
      $region47: #{tpu_custom_call.1} parent=5 // pred_region
        %s483 = ssub.s32 %s16, 2
        // Predicated region
        $region49: #{tpu_custom_call.1} parent=47 // pred_check
          %p484 = pneg %p137
        $region50: #{tpu_custom_call.1} parent=47 // pred_check_branch
          %486 = sbr.rel (%p484) target = $region52
        $region51: #{tpu_custom_call.1} parent=47 // pred_region
          %s487 = sand.u32 %s122, 1
          %s488 = scalar_lea.sflag [#allocation4], %s487
          %s489 = sand.u32 %s122, 1
          %s490 = smul.addr %s489, 128
          %s491 = scalar_lea.vmem [#allocation7], %s490
          %492 = dma.done %s488, 2048
        $region52: #{tpu_custom_call.1} parent=47 // pred_fallthru
          _
      $region48: #{tpu_custom_call.1} parent=5 // pred_fallthru
        _
    $region6: #{tpu_custom_call.1} parent=1 // loop_footer
      %s20 = sadd.s32 1, %s16
    $region7: #{tpu_custom_call.1} parent=1 // loop_footer_branch
      %15 = sbr.rel target = $region3
    $region8: #{tpu_custom_call.1} parent=1 // loop_exit
      _
    %493 = vsyncpa [#allocation3], 1
    %s494 = scalar_lea.sflag [#allocation3], 1
    %495 = vsyncpa %s494, 1
    %496 = vsyncpa [#allocation6], 1
    %497 = vsyncpa [#allocation4], 1
    %s498 = scalar_lea.sflag [#allocation4], 1
    %499 = vsyncpa %s498, 1

</llo_original>
